<compile_context>
chip_gen: v7x
topology: tpu7x:2x2x1
jax: 0.10.0
libtpu: 0.0.40
codegen_flags: <defaults>
</compile_context>

<pallas_src>
import functools

import jax
import jax.numpy as jnp
from jax.experimental import pallas as pl
from jax.experimental.pallas import tpu as pltpu

HIDDEN = 512
LANE = 128
SUBLANE = 8
MAX_TB = 512  # batch tile cap (comfortably inside v7x 64 MiB VMEM)


def _round_up(x, m):
    return (x + m - 1) // m * m


def _mlp_kernel(x_ref, w1_ref, b1_ref, w2_ref, b2_ref, w3_ref, b3_ref, o_ref):
    # x_ref: (TB, in_pad) bf16; weights bf16; biases f32; o_ref: (TB, out_pad) f32
    x = x_ref[...]
    h1 = jnp.dot(x, w1_ref[...], preferred_element_type=jnp.float32) + b1_ref[...]
    h1 = jnp.maximum(h1, 0.0).astype(jnp.bfloat16)
    h2 = jnp.dot(h1, w2_ref[...], preferred_element_type=jnp.float32) + b2_ref[...]
    h2 = jnp.maximum(h2, 0.0).astype(jnp.bfloat16)
    o_ref[...] = jnp.dot(h2, w3_ref[...], preferred_element_type=jnp.float32) + b3_ref[...]


def prepare_params(params):
    """Pad in/out dims to 128 lanes and cast weights to bf16 once (outside the kernel)."""
    w1, b1 = params["w1"], params["b1"]
    w2, b2 = params["w2"], params["b2"]
    w3, b3 = params["w3"], params["b3"]
    in_dim, _ = w1.shape
    _, out_dim = w3.shape
    in_pad = _round_up(in_dim, LANE)
    out_pad = _round_up(out_dim, LANE)

    w1p = jnp.zeros((in_pad, HIDDEN), jnp.float32).at[:in_dim, :].set(w1)
    w3p = jnp.zeros((HIDDEN, out_pad), jnp.float32).at[:, :out_dim].set(w3)
    b3p = jnp.zeros((1, out_pad), jnp.float32).at[:, :out_dim].set(b3)

    return {
        "w1": w1p.astype(jnp.bfloat16),
        "b1": b1.astype(jnp.float32).reshape(1, HIDDEN),
        "w2": w2.astype(jnp.bfloat16),
        "b2": b2.astype(jnp.float32).reshape(1, HIDDEN),
        "w3": w3p.astype(jnp.bfloat16),
        "b3": b3p.astype(jnp.float32),
        "in_dim": in_dim,
        "out_dim": out_dim,
        "in_pad": in_pad,
        "out_pad": out_pad,
    }


@functools.partial(jax.jit, static_argnames=("in_dim", "out_dim", "in_pad", "out_pad"))
def _feedforward_impl(obs, w1, b1, w2, b2, w3, b3, *, in_dim, out_dim, in_pad, out_pad):
    obs = jnp.asarray(obs)
    if obs.ndim == 1:  # torch module accepts a single observation too
        obs = obs[None, :]
    obs = obs.astype(jnp.float32)  # mirrors torch.tensor(obs, dtype=torch.float)
    B = obs.shape[0]

    # Batch tile: multiple of 8 sublanes, capped at MAX_TB; pad batch to a whole tile.
    TB = min(MAX_TB, _round_up(B, SUBLANE))
    B_pad = _round_up(B, TB)
    grid = (B_pad // TB,)

    # Cast first (halves the pad copy), then zero-pad batch rows and input lanes.
    x = jnp.pad(obs.astype(jnp.bfloat16), ((0, B_pad - B), (0, in_pad - in_dim)))

    resident = lambda shape: pl.BlockSpec(shape, lambda i: (0, 0))  # weights: DMA once

    out_padded = pl.pallas_call(
        _mlp_kernel,
        out_shape=jax.ShapeDtypeStruct((B_pad, out_pad), jnp.float32),
        grid=grid,
        in_specs=[
            pl.BlockSpec((TB, in_pad), lambda i: (i, 0)),   # x: batch-tiled
            resident((in_pad, HIDDEN)),                     # w1
            resident((1, HIDDEN)),                          # b1
            resident((HIDDEN, HIDDEN)),                     # w2
            resident((1, HIDDEN)),                          # b2
            resident((HIDDEN, out_pad)),                    # w3
            resident((1, out_pad)),                         # b3
        ],
        out_specs=pl.BlockSpec((TB, out_pad), lambda i: (i, 0)),
        compiler_params=pltpu.CompilerParams(
            dimension_semantics=("parallel",),              # megacore split on v7x
        ),
    )(x, w1, b1, w2, b2, w3, b3)

    return out_padded[:B, :out_dim]


def feedforward_nn(obs, prepared):
    """Forward pass of FeedForwardNN.

    obs:      [B, in_dim] (or [in_dim]) array; cast to float32 like the torch module
    prepared: output of prepare_params() (padded, bf16 weights / f32 biases)
    returns   [B, out_dim] float32
    """
    return _feedforward_impl(
        obs,
        prepared["w1"], prepared["b1"],
        prepared["w2"], prepared["b2"],
        prepared["w3"], prepared["b3"],
        in_dim=prepared["in_dim"], out_dim=prepared["out_dim"],
        in_pad=prepared["in_pad"], out_pad=prepared["out_pad"],
    )


def init_params(key, in_dim, out_dim):
    """Deterministic init mimicking nn.Linear default (uniform +/- 1/sqrt(fan_in)), f32."""
    ks = jax.random.split(key, 6)

    def linear(kw, kb, fan_in, fan_out):
        bound = 1.0 / jnp.sqrt(jnp.float32(fan_in))
        w = jax.random.uniform(kw, (fan_in, fan_out), jnp.float32, -bound, bound)
        b = jax.random.uniform(kb, (1, fan_out), jnp.float32, -bound, bound)
        return w, b

    w1, b1 = linear(ks[0], ks[1], in_dim, HIDDEN)
    w2, b2 = linear(ks[2], ks[3], HIDDEN, HIDDEN)
    w3, b3 = linear(ks[4], ks[5], HIDDEN, out_dim)
    return {"w1": w1, "b1": b1, "w2": w2, "b2": b2, "w3": w3, "b3": b3}


def _reference(obs, prepared):
    """Pure-JAX reference mirroring the kernel's bf16-input / f32-accumulate numerics."""
    in_dim, out_dim = prepared["in_dim"], prepared["out_dim"]
    x = jnp.asarray(obs, jnp.float32).astype(jnp.bfloat16).astype(jnp.float32)
    w1 = prepared["w1"][:in_dim, :].astype(jnp.float32)
    w2 = prepared["w2"].astype(jnp.float32)
    w3 = prepared["w3"][:, :out_dim].astype(jnp.float32)
    h1 = jnp.maximum(x @ w1 + prepared["b1"], 0.0)
    h1 = h1.astype(jnp.bfloat16).astype(jnp.float32)
    h2 = jnp.maximum(h1 @ w2 + prepared["b2"], 0.0)
    h2 = h2.astype(jnp.bfloat16).astype(jnp.float32)
    return h2 @ w3 + prepared["b3"][:, :out_dim]


if __name__ == "__main__":
    key = jax.random.PRNGKey(0)
    k_obs, k_par = jax.random.split(key)

    B, in_dim, out_dim = 8, 16, 8
    obs = jax.random.normal(k_obs, (B, in_dim), jnp.float32)
    params = init_params(k_par, in_dim, out_dim)
    prepared = prepare_params(params)

    out = feedforward_nn(obs, prepared)
    out = jax.block_until_ready(out)

    ref = _reference(obs, prepared)
    assert out.shape == (B, out_dim)
    # bf16 MXU inputs + f32 accumulation: small ordering/rounding differences allowed.
    assert jnp.allclose(out, ref, atol=1e-2, rtol=1e-2), float(jnp.max(jnp.abs(out - ref)))

    print("KERNEL_OK")
</pallas_src>

<mosaic_0001>
module attributes {stable_mosaic.version = 11 : i64} {
  func.func @_mlp_kernel(%arg0: i32, %arg1: memref<8x128xbf16, #tpu.memory_space<vmem>>, %arg2: memref<128x512xbf16, #tpu.memory_space<vmem>>, %arg3: memref<1x512xf32, #tpu.memory_space<vmem>>, %arg4: memref<512x512xbf16, #tpu.memory_space<vmem>>, %arg5: memref<1x512xf32, #tpu.memory_space<vmem>>, %arg6: memref<512x128xbf16, #tpu.memory_space<vmem>>, %arg7: memref<1x128xf32, #tpu.memory_space<vmem>>, %arg8: memref<8x128xf32, #tpu.memory_space<vmem>>) attributes {dimension_semantics = [#tpu.dimension_semantics<parallel>], iteration_bounds = array<i64: 1>, scalar_prefetch = 0 : i64, scratch_operands = 0 : i64, tpu.core_type = #tpu.core_type<tc>, window_params = [{transform_indices = @transform_0, window_bounds = array<i64: 8, 128>}, {pipeline_mode = #tpu.pipeline_mode<synchronous>, transform_indices = @transform_1, window_bounds = array<i64: 128, 512>}, {pipeline_mode = #tpu.pipeline_mode<synchronous>, transform_indices = @transform_2, window_bounds = array<i64: 1, 512>}, {pipeline_mode = #tpu.pipeline_mode<synchronous>, transform_indices = @transform_3, window_bounds = array<i64: 512, 512>}, {pipeline_mode = #tpu.pipeline_mode<synchronous>, transform_indices = @transform_4, window_bounds = array<i64: 1, 512>}, {pipeline_mode = #tpu.pipeline_mode<synchronous>, transform_indices = @transform_5, window_bounds = array<i64: 512, 128>}, {pipeline_mode = #tpu.pipeline_mode<synchronous>, transform_indices = @transform_6, window_bounds = array<i64: 1, 128>}, {transform_indices = @transform_7, window_bounds = array<i64: 8, 128>}]} {
    %c0 = arith.constant 0 : index
    %c0_0 = arith.constant 0 : index
    %0 = vector.load %arg1[%c0, %c0_0] : memref<8x128xbf16, #tpu.memory_space<vmem>>, vector<8x128xbf16>
    %c0_1 = arith.constant 0 : index
    %c0_2 = arith.constant 0 : index
    %1 = vector.load %arg2[%c0_1, %c0_2] : memref<128x512xbf16, #tpu.memory_space<vmem>>, vector<128x512xbf16>
    %cst = arith.constant dense<0.000000e+00> : vector<8x512xf32>
    %2 = tpu.matmul %0, %1, %cst {dimension_numbers = #tpu.dot_dimension_numbers<[1], [0], [0], [1], [0, 0, 1, 1], [], []>} : vector<8x128xbf16>, vector<128x512xbf16>, vector<8x512xf32> -> vector<8x512xf32>
    %c0_3 = arith.constant 0 : index
    %c0_4 = arith.constant 0 : index
    %3 = vector.load %arg3[%c0_3, %c0_4] : memref<1x512xf32, #tpu.memory_space<vmem>>, vector<1x512xf32>
    %4 = vector.broadcast %3 : vector<1x512xf32> to vector<8x512xf32>
    %5 = arith.addf %2, %4 : vector<8x512xf32>
    %cst_5 = arith.constant 0.000000e+00 : f32
    %6 = vector.broadcast %cst_5 : f32 to vector<8x512xf32>
    %7 = arith.maximumf %5, %6 : vector<8x512xf32>
    %8 = arith.truncf %7 : vector<8x512xf32> to vector<8x512xbf16>
    %c0_6 = arith.constant 0 : index
    %c0_7 = arith.constant 0 : index
    %9 = vector.load %arg4[%c0_6, %c0_7] : memref<512x512xbf16, #tpu.memory_space<vmem>>, vector<512x512xbf16>
    %cst_8 = arith.constant dense<0.000000e+00> : vector<8x512xf32>
    %10 = tpu.matmul %8, %9, %cst_8 {dimension_numbers = #tpu.dot_dimension_numbers<[1], [0], [0], [1], [0, 0, 1, 1], [], []>} : vector<8x512xbf16>, vector<512x512xbf16>, vector<8x512xf32> -> vector<8x512xf32>
    %c0_9 = arith.constant 0 : index
    %c0_10 = arith.constant 0 : index
    %11 = vector.load %arg5[%c0_9, %c0_10] : memref<1x512xf32, #tpu.memory_space<vmem>>, vector<1x512xf32>
    %12 = vector.broadcast %11 : vector<1x512xf32> to vector<8x512xf32>
    %13 = arith.addf %10, %12 : vector<8x512xf32>
    %cst_11 = arith.constant 0.000000e+00 : f32
    %14 = vector.broadcast %cst_11 : f32 to vector<8x512xf32>
    %15 = arith.maximumf %13, %14 : vector<8x512xf32>
    %16 = arith.truncf %15 : vector<8x512xf32> to vector<8x512xbf16>
    %c0_12 = arith.constant 0 : index
    %c0_13 = arith.constant 0 : index
    %17 = vector.load %arg6[%c0_12, %c0_13] : memref<512x128xbf16, #tpu.memory_space<vmem>>, vector<512x128xbf16>
    %cst_14 = arith.constant dense<0.000000e+00> : vector<8x128xf32>
    %18 = tpu.matmul %16, %17, %cst_14 {dimension_numbers = #tpu.dot_dimension_numbers<[1], [0], [0], [1], [0, 0, 1, 1], [], []>} : vector<8x512xbf16>, vector<512x128xbf16>, vector<8x128xf32> -> vector<8x128xf32>
    %c0_15 = arith.constant 0 : index
    %c0_16 = arith.constant 0 : index
    %19 = vector.load %arg7[%c0_15, %c0_16] : memref<1x128xf32, #tpu.memory_space<vmem>>, vector<1x128xf32>
    %20 = vector.broadcast %19 : vector<1x128xf32> to vector<8x128xf32>
    %21 = arith.addf %18, %20 : vector<8x128xf32>
    %c0_17 = arith.constant 0 : index
    %c0_18 = arith.constant 0 : index
    %22 = vector.load %arg8[%c0_17, %c0_18] : memref<8x128xf32, #tpu.memory_space<vmem>>, vector<8x128xf32>
    tpu.vector_store %arg8[%c0_17, %c0_18], %21 {strides = array<i32>} : memref<8x128xf32, #tpu.memory_space<vmem>>, vector<8x128xf32>,
    return
  }
  func.func @transform_0(%arg0: i32) -> (i32, i32) {
    %c0_i32 = arith.constant 0 : i32
    %c0_i32_0 = arith.constant 0 : i32
    return %arg0, %c0_i32 : i32, i32
  }
  func.func @transform_1(%arg0: i32) -> (i32, i32) {
    %c0_i32 = arith.constant 0 : i32
    %c0_i32_0 = arith.constant 0 : i32
    %c0_i32_1 = arith.constant 0 : i32
    return %c0_i32, %c0_i32_0 : i32, i32
  }
  func.func @transform_2(%arg0: i32) -> (i32, i32) {
    %c0_i32 = arith.constant 0 : i32
    %c0_i32_0 = arith.constant 0 : i32
    %c0_i32_1 = arith.constant 0 : i32
    return %c0_i32, %c0_i32_0 : i32, i32
  }
  func.func @transform_3(%arg0: i32) -> (i32, i32) {
    %c0_i32 = arith.constant 0 : i32
    %c0_i32_0 = arith.constant 0 : i32
    %c0_i32_1 = arith.constant 0 : i32
    return %c0_i32, %c0_i32_0 : i32, i32
  }
  func.func @transform_4(%arg0: i32) -> (i32, i32) {
    %c0_i32 = arith.constant 0 : i32
    %c0_i32_0 = arith.constant 0 : i32
    %c0_i32_1 = arith.constant 0 : i32
    return %c0_i32, %c0_i32_0 : i32, i32
  }
  func.func @transform_5(%arg0: i32) -> (i32, i32) {
    %c0_i32 = arith.constant 0 : i32
    %c0_i32_0 = arith.constant 0 : i32
    %c0_i32_1 = arith.constant 0 : i32
    return %c0_i32, %c0_i32_0 : i32, i32
  }
  func.func @transform_6(%arg0: i32) -> (i32, i32) {
    %c0_i32 = arith.constant 0 : i32
    %c0_i32_0 = arith.constant 0 : i32
    %c0_i32_1 = arith.constant 0 : i32
    return %c0_i32, %c0_i32_0 : i32, i32
  }
  func.func @transform_7(%arg0: i32) -> (i32, i32) {
    %c0_i32 = arith.constant 0 : i32
    %c0_i32_0 = arith.constant 0 : i32
    return %arg0, %c0_i32 : i32, i32
  }
}

</mosaic_0001>

<llo_original>
// kernel: _feedforward_impl.1
$region0: #{_feedforward_impl.1}
  #allocation0 [shape = 'u32[]', space=smem, size = 0x4, offset = 0x4, fixed_abs, tag = 'smem constant byte address 0x4 - core index']
  #allocation1 [shape = 'u32[144,128]{1,0:T(1,128)}', space=vmem, size = 0x12000, scoped, tag = 'internal scratch']
  %s0 = inlined_call_operand.vmem [shape: bf16[8,128], index: 0, kind: input, shape index: {}]
  %s1 = inlined_call_operand.hbm [shape: bf16[128,512], index: 1, kind: input, shape index: {}]
  %s2 = inlined_call_operand.vmem [shape: f32[1,512], index: 2, kind: input, shape index: {}]
  %s3 = inlined_call_operand.hbm [shape: bf16[512,512], index: 3, kind: input, shape index: {}]
  %s4 = inlined_call_operand.vmem [shape: f32[1,512], index: 4, kind: input, shape index: {}]
  %s5 = inlined_call_operand.hbm [shape: bf16[512,128], index: 5, kind: input, shape index: {}]
  %s6 = inlined_call_operand.vmem [shape: f32[1,128], index: 6, kind: input, shape index: {}]
  %s7 = inlined_call_operand.hbm [shape: f32[8,128], index: 7, kind: output, shape index: {}]
  %s8 = sld [smem:[#allocation0]]
  $region50: #{_feedforward_impl.1} parent=0
    _
  %s10 = ssub.s32 1, %s8
  %s11 = scalar_select 0, %s10, %s8
  $region1: #{_feedforward_impl.1} parent=0
    #allocation2 [shape = 'u8[131072]{0}', space=vmem, size = 0x20000, scoped, tag = 'input window, operand 1, single buffered']
    #allocation3 [shape = 's32[1]{0}', space=sflag, size = 0x4, scoped, tag = 'scoped memory for _feedforward_impl.1']
    #allocation4 [shape = 's32[1]{0}', space=sflag, size = 0x4, scoped, tag = 'scoped memory for _feedforward_impl.1']
    #allocation5 [shape = 'u8[524288]{0}', space=vmem, size = 0x80000, scoped, tag = 'input window, operand 3, single buffered']
    #allocation6 [shape = 's32[1]{0}', space=sflag, size = 0x4, scoped, tag = 'scoped memory for _feedforward_impl.1']
    #allocation7 [shape = 'u8[131072]{0}', space=vmem, size = 0x20000, scoped, tag = 'input window, operand 5, single buffered']
    #allocation8 [shape = 'u8[4096]{0}', space=vmem, size = 0x1000, scoped, tag = 'output window, operand 0, single buffered']
    %12 = vsyncpa [#allocation3], 0
    %13 = vsyncpa [#allocation6], 0
    %14 = vsyncpa [#allocation4], 0
    // Predicated region
    $region2: #{_feedforward_impl.1} parent=1 // pred_check
      _
    $region3: #{_feedforward_impl.1} parent=1 // pred_check_branch
      %16 = sbr.rel (0) target = $region5
    $region4: #{_feedforward_impl.1} parent=1 // pred_region
      _
    $region5: #{_feedforward_impl.1} parent=1 // pred_fallthru
      _
    // Predicated region
    $region6: #{_feedforward_impl.1} parent=1 // pred_check
      _
    $region7: #{_feedforward_impl.1} parent=1 // pred_check_branch
      %18 = sbr.rel (0) target = $region9
    $region8: #{_feedforward_impl.1} parent=1 // pred_region
      %s20 = ssub.s32 4096, 4096
      %21 = vsyncadd [#allocation3], %s20
      %s22 = sshll.u32 [#allocation2], 4
      %s23 = int_to_ptr.vmem [resolvable:$true] %s22
      %28 = dma.hbm_to_vmem [thread:$0]  %s1, 4096, %s23, [#allocation3], 256, 256, 16
    $region9: #{_feedforward_impl.1} parent=1 // pred_fallthru
      _
    // Predicated region
    $region10: #{_feedforward_impl.1} parent=1 // pred_check
      _
    $region11: #{_feedforward_impl.1} parent=1 // pred_check_branch
      %30 = sbr.rel (0) target = $region13
    $region12: #{_feedforward_impl.1} parent=1 // pred_region
      _
    $region13: #{_feedforward_impl.1} parent=1 // pred_fallthru
      _
    // Predicated region
    $region14: #{_feedforward_impl.1} parent=1 // pred_check
      _
    $region15: #{_feedforward_impl.1} parent=1 // pred_check_branch
      %32 = sbr.rel (0) target = $region17
    $region16: #{_feedforward_impl.1} parent=1 // pred_region
      %s34 = ssub.s32 16384, 16384
      %35 = vsyncadd [#allocation6], %s34
      %s36 = sshll.u32 [#allocation5], 4
      %s37 = int_to_ptr.vmem [resolvable:$true] %s36
      %42 = dma.hbm_to_vmem [thread:$0]  %s3, 16384, %s37, [#allocation6], 256, 256, 16
    $region17: #{_feedforward_impl.1} parent=1 // pred_fallthru
      _
    // Predicated region
    $region18: #{_feedforward_impl.1} parent=1 // pred_check
      _
    $region19: #{_feedforward_impl.1} parent=1 // pred_check_branch
      %44 = sbr.rel (0) target = $region21
    $region20: #{_feedforward_impl.1} parent=1 // pred_region
      _
    $region21: #{_feedforward_impl.1} parent=1 // pred_fallthru
      _
    // Predicated region
    $region22: #{_feedforward_impl.1} parent=1 // pred_check
      _
    $region23: #{_feedforward_impl.1} parent=1 // pred_check_branch
      %46 = sbr.rel (0) target = $region25
    $region24: #{_feedforward_impl.1} parent=1 // pred_region
      %s48 = ssub.s32 4096, 4096
      %49 = vsyncadd [#allocation6], %s48
      %s50 = sshll.u32 [#allocation7], 4
      %s51 = int_to_ptr.vmem [resolvable:$true] %s50
      %56 = dma.hbm_to_vmem [thread:$0]  %s5, 4096, %s51, [#allocation6], 64, 64, 4
    $region25: #{_feedforward_impl.1} parent=1 // pred_fallthru
      _
    // Predicated region
    $region26: #{_feedforward_impl.1} parent=1 // pred_check
      _
    $region27: #{_feedforward_impl.1} parent=1 // pred_check_branch
      %58 = sbr.rel (0) target = $region29
    $region28: #{_feedforward_impl.1} parent=1 // pred_region
      _
    $region29: #{_feedforward_impl.1} parent=1 // pred_fallthru
      _
    // Predicated region
    $region30: #{_feedforward_impl.1} parent=1 // pred_check
      _
    $region31: #{_feedforward_impl.1} parent=1 // pred_check_branch
      %60 = sbr.rel (0) target = $region33
    $region32: #{_feedforward_impl.1} parent=1 // pred_region
      %61 = dma.done [#allocation3], 4096
    $region33: #{_feedforward_impl.1} parent=1 // pred_fallthru
      _
    // Predicated region
    $region34: #{_feedforward_impl.1} parent=1 // pred_check
      _
    $region35: #{_feedforward_impl.1} parent=1 // pred_check_branch
      %63 = sbr.rel (0) target = $region37
    $region36: #{_feedforward_impl.1} parent=1 // pred_region
      %64 = dma.done [#allocation6], 16384
    $region37: #{_feedforward_impl.1} parent=1 // pred_fallthru
      _
    // Predicated region
    $region38: #{_feedforward_impl.1} parent=1 // pred_check
      _
    $region39: #{_feedforward_impl.1} parent=1 // pred_check_branch
      %66 = sbr.rel (0) target = $region41
    $region40: #{_feedforward_impl.1} parent=1 // pred_region
      %67 = dma.done [#allocation6], 4096
    $region41: #{_feedforward_impl.1} parent=1 // pred_fallthru
      _
    %v69 = vld [vmem:[%s0] sm:$0xf]
    %v70 = vld [vmem:[#allocation2] sm:$0xff]
    %v71 = vld [vmem:[#allocation2 + $0x8] sm:$0xff]
    %v72 = vld [vmem:[#allocation2 + $0x10] sm:$0xff]
    %v73 = vld [vmem:[#allocation2 + $0x18] sm:$0xff]
    %v74 = vld [vmem:[#allocation2 + $0x20] sm:$0xff]
    %v75 = vld [vmem:[#allocation2 + $0x28] sm:$0xff]
    %v76 = vld [vmem:[#allocation2 + $0x30] sm:$0xff]
    %v77 = vld [vmem:[#allocation2 + $0x38] sm:$0xff]
    %v78 = vld [vmem:[#allocation2 + $0x40] sm:$0xff]
    %v79 = vld [vmem:[#allocation2 + $0x48] sm:$0xff]
    %v80 = vld [vmem:[#allocation2 + $0x50] sm:$0xff]
    %v81 = vld [vmem:[#allocation2 + $0x58] sm:$0xff]
    %v82 = vld [vmem:[#allocation2 + $0x60] sm:$0xff]
    %v83 = vld [vmem:[#allocation2 + $0x68] sm:$0xff]
    %v84 = vld [vmem:[#allocation2 + $0x70] sm:$0xff]
    %v85 = vld [vmem:[#allocation2 + $0x78] sm:$0xff]
    %v86 = vld [vmem:[#allocation2 + $0x80] sm:$0xff]
    %v87 = vld [vmem:[#allocation2 + $0x88] sm:$0xff]
    %v88 = vld [vmem:[#allocation2 + $0x90] sm:$0xff]
    %v89 = vld [vmem:[#allocation2 + $0x98] sm:$0xff]
    %v90 = vld [vmem:[#allocation2 + $0xa0] sm:$0xff]
    %v91 = vld [vmem:[#allocation2 + $0xa8] sm:$0xff]
    %v92 = vld [vmem:[#allocation2 + $0xb0] sm:$0xff]
    %v93 = vld [vmem:[#allocation2 + $0xb8] sm:$0xff]
    %v94 = vld [vmem:[#allocation2 + $0xc0] sm:$0xff]
    %v95 = vld [vmem:[#allocation2 + $0xc8] sm:$0xff]
    %v96 = vld [vmem:[#allocation2 + $0xd0] sm:$0xff]
    %v97 = vld [vmem:[#allocation2 + $0xd8] sm:$0xff]
    %v98 = vld [vmem:[#allocation2 + $0xe0] sm:$0xff]
    %v99 = vld [vmem:[#allocation2 + $0xe8] sm:$0xff]
    %v100 = vld [vmem:[#allocation2 + $0xf0] sm:$0xff]
    %v101 = vld [vmem:[#allocation2 + $0xf8] sm:$0xff]
    %v102 = vld [vmem:[%s2] sm:$0xf]
    %v104 = vlaneseq
    %v105 = vshrl.u32 %v104, 7
    %v106 = vsub.s32 0, %v105
    %v107 = vrot.slane %v102, %v106
    %v108 = vlaneseq
    %v109 = vshrl.u32 %v108, 7
    %v110 = vsub.s32 1, %v109
    %v111 = vrot.slane %v102, %v110
    %v112 = vlaneseq
    %v113 = vshrl.u32 %v112, 7
    %v114 = vsub.s32 2, %v113
    %v115 = vrot.slane %v102, %v114
    %v116 = vlaneseq
    %v117 = vshrl.u32 %v116, 7
    %v118 = vsub.s32 3, %v117
    %v119 = vrot.slane %v102, %v118
    %v156 = vunpack.c.l.b16 %v70
    %v157 = vunpack.c.h.b16 %v70
    %v158 = vunpack.c.l.b16 %v71
    %v159 = vunpack.c.h.b16 %v71
    %v160 = vunpack.c.l.b16 %v72
    %v161 = vunpack.c.h.b16 %v72
    %v162 = vunpack.c.l.b16 %v73
    %v163 = vunpack.c.h.b16 %v73
    %v164 = vunpack.c.l.b16 %v74
    %v165 = vunpack.c.h.b16 %v74
    %v166 = vunpack.c.l.b16 %v75
    %v167 = vunpack.c.h.b16 %v75
    %v168 = vunpack.c.l.b16 %v76
    %v169 = vunpack.c.h.b16 %v76
    %v170 = vunpack.c.l.b16 %v77
    %v171 = vunpack.c.h.b16 %v77
    %v172 = vunpack.c.l.b16 %v78
    %v173 = vunpack.c.h.b16 %v78
    %v174 = vunpack.c.l.b16 %v79
    %v175 = vunpack.c.h.b16 %v79
    %v176 = vunpack.c.l.b16 %v80
    %v177 = vunpack.c.h.b16 %v80
    %v178 = vunpack.c.l.b16 %v81
    %v179 = vunpack.c.h.b16 %v81
    %v180 = vunpack.c.l.b16 %v82
    %v181 = vunpack.c.h.b16 %v82
    %v182 = vunpack.c.l.b16 %v83
    %v183 = vunpack.c.h.b16 %v83
    %v184 = vunpack.c.l.b16 %v84
    %v185 = vunpack.c.h.b16 %v84
    %v186 = vunpack.c.l.b16 %v85
    %v187 = vunpack.c.h.b16 %v85
    %v188 = vunpack.c.l.b16 %v86
    %v189 = vunpack.c.h.b16 %v86
    %v190 = vunpack.c.l.b16 %v87
    %v191 = vunpack.c.h.b16 %v87
    %v192 = vunpack.c.l.b16 %v88
    %v193 = vunpack.c.h.b16 %v88
    %v194 = vunpack.c.l.b16 %v89
    %v195 = vunpack.c.h.b16 %v89
    %v196 = vunpack.c.l.b16 %v90
    %v197 = vunpack.c.h.b16 %v90
    %v198 = vunpack.c.l.b16 %v91
    %v199 = vunpack.c.h.b16 %v91
    %v200 = vunpack.c.l.b16 %v92
    %v201 = vunpack.c.h.b16 %v92
    %v202 = vunpack.c.l.b16 %v93
    %v203 = vunpack.c.h.b16 %v93
    %v204 = vunpack.c.l.b16 %v94
    %v205 = vunpack.c.h.b16 %v94
    %v206 = vunpack.c.l.b16 %v95
    %v207 = vunpack.c.h.b16 %v95
    %v208 = vunpack.c.l.b16 %v96
    %v209 = vunpack.c.h.b16 %v96
    %v210 = vunpack.c.l.b16 %v97
    %v211 = vunpack.c.h.b16 %v97
    %v212 = vunpack.c.l.b16 %v98
    %v213 = vunpack.c.h.b16 %v98
    %v214 = vunpack.c.l.b16 %v99
    %v215 = vunpack.c.h.b16 %v99
    %v216 = vunpack.c.l.b16 %v100
    %v217 = vunpack.c.h.b16 %v100
    %v218 = vunpack.c.l.b16 %v101
    %v219 = vunpack.c.h.b16 %v101
    %v220 = vpack.c.b16 %v160, %v156
    %v221 = vpack.c.b16 %v161, %v157
    %v222 = vpack.c.b16 %v162, %v158
    %v223 = vpack.c.b16 %v163, %v159
    %v224 = vpack.c.b16 %v168, %v164
    %v225 = vpack.c.b16 %v169, %v165
    %v226 = vpack.c.b16 %v170, %v166
    %v227 = vpack.c.b16 %v171, %v167
    %v228 = vpack.c.b16 %v176, %v172
    %v229 = vpack.c.b16 %v177, %v173
    %v230 = vpack.c.b16 %v178, %v174
    %v231 = vpack.c.b16 %v179, %v175
    %v232 = vpack.c.b16 %v184, %v180
    %v233 = vpack.c.b16 %v185, %v181
    %v234 = vpack.c.b16 %v186, %v182
    %v235 = vpack.c.b16 %v187, %v183
    %v236 = vpack.c.b16 %v192, %v188
    %v237 = vpack.c.b16 %v193, %v189
    %v238 = vpack.c.b16 %v194, %v190
    %v239 = vpack.c.b16 %v195, %v191
    %v240 = vpack.c.b16 %v200, %v196
    %v241 = vpack.c.b16 %v201, %v197
    %v242 = vpack.c.b16 %v202, %v198
    %v243 = vpack.c.b16 %v203, %v199
    %v244 = vpack.c.b16 %v208, %v204
    %v245 = vpack.c.b16 %v209, %v205
    %v246 = vpack.c.b16 %v210, %v206
    %v247 = vpack.c.b16 %v211, %v207
    %v248 = vpack.c.b16 %v216, %v212
    %v249 = vpack.c.b16 %v217, %v213
    %v250 = vpack.c.b16 %v218, %v214
    %v251 = vpack.c.b16 %v219, %v215
    %284 = vmatprep.subr.bf16.mxu0 %v221
    %285 = vmatpush1.bf16.msra.mxu0 %v220
    %286 = vmatprep.subr.bf16.mxu0 %v225
    %287 = vmatpush1.bf16.msra.mxu0 %v224
    %288 = vmatprep.subr.bf16.mxu0 %v229
    %289 = vmatpush1.bf16.msra.mxu0 %v228
    %290 = vmatprep.subr.bf16.mxu0 %v233
    %291 = vmatpush1.bf16.msra.mxu0 %v232
    %292 = vmatprep.subr.bf16.mxu0 %v237
    %293 = vmatpush1.bf16.msra.mxu0 %v236
    %294 = vmatprep.subr.bf16.mxu0 %v241
    %295 = vmatpush1.bf16.msra.mxu0 %v240
    %296 = vmatprep.subr.bf16.mxu0 %v245
    %297 = vmatpush1.bf16.msra.mxu0 %v244
    %298 = vmatprep.subr.bf16.mxu0 %v249
    %299 = vmatpush1.bf16.msra.mxu0 %v248
    %300 = vmatprep.subr.bf16.mxu0 0
    %301 = vmatpush1.bf16.msra.mxu0 0
    %302 = vmatprep.subr.bf16.mxu0 0
    %303 = vmatpush1.bf16.msra.mxu0 0
    %304 = vmatprep.subr.bf16.mxu0 0
    %305 = vmatpush1.bf16.msra.mxu0 0
    %306 = vmatprep.subr.bf16.mxu0 0
    %307 = vmatpush1.bf16.msra.mxu0 0
    %308 = vmatprep.subr.bf16.mxu0 0
    %309 = vmatpush1.bf16.msra.mxu0 0
    %310 = vmatprep.subr.bf16.mxu0 0
    %311 = vmatpush1.bf16.msra.mxu0 0
    %312 = vmatprep.subr.bf16.mxu0 0
    %313 = vmatpush1.bf16.msra.mxu0 0
    %314 = vmatprep.subr.bf16.mxu0 0
    %315 = vmatpush1.bf16.msra.mxu0 0
    %316 = vmatprep.mubr.bf16.mxu0 0
    %317 = vmatmul.mubr.bf16.gmra.mrb[0].mxu0 %v69
    %v318 = vpop.f32.mrb[0].mxu0
    %v319 = vadd.f32 %v107, %v318
    %v320 = vpop.f32.mrb[0].mxu0
    %v321 = vadd.f32 %v111, %v320
    %v322 = vpop.f32.mrb[0].mxu0
    %v323 = vpop.f32.mrb[0].mxu0
    %324 = vdwg.mxu0
    %325 = vmatprep.subr.bf16.mxu0 %v223
    %326 = vmatpush1.bf16.msra.mxu0 %v222
    %327 = vmatprep.subr.bf16.mxu0 %v227
    %328 = vmatpush1.bf16.msra.mxu0 %v226
    %329 = vmatprep.subr.bf16.mxu0 %v231
    %330 = vmatpush1.bf16.msra.mxu0 %v230
    %331 = vmatprep.subr.bf16.mxu0 %v235
    %332 = vmatpush1.bf16.msra.mxu0 %v234
    %333 = vmatprep.subr.bf16.mxu0 %v239
    %334 = vmatpush1.bf16.msra.mxu0 %v238
    %335 = vmatprep.subr.bf16.mxu0 %v243
    %336 = vmatpush1.bf16.msra.mxu0 %v242
    %337 = vmatprep.subr.bf16.mxu0 %v247
    %338 = vmatpush1.bf16.msra.mxu0 %v246
    %339 = vmatprep.subr.bf16.mxu0 %v251
    %340 = vmatpush1.bf16.msra.mxu0 %v250
    %341 = vmatprep.subr.bf16.mxu0 0
    %342 = vmatpush1.bf16.msra.mxu0 0
    %343 = vmatprep.subr.bf16.mxu0 0
    %344 = vmatpush1.bf16.msra.mxu0 0
    %345 = vmatprep.subr.bf16.mxu0 0
    %346 = vmatpush1.bf16.msra.mxu0 0
    %347 = vmatprep.subr.bf16.mxu0 0
    %348 = vmatpush1.bf16.msra.mxu0 0
    %349 = vmatprep.subr.bf16.mxu0 0
    %350 = vmatpush1.bf16.msra.mxu0 0
    %351 = vmatprep.subr.bf16.mxu0 0
    %352 = vmatpush1.bf16.msra.mxu0 0
    %353 = vmatprep.subr.bf16.mxu0 0
    %354 = vmatpush1.bf16.msra.mxu0 0
    %355 = vmatprep.subr.bf16.mxu0 0
    %356 = vmatpush1.bf16.msra.mxu0 0
    %357 = vmatprep.mubr.bf16.mxu0 0
    %358 = vmatmul.mubr.bf16.gmra.mrb[0].mxu0 %v69
    %v359 = vpop.f32.mrb[0].mxu0
    %v360 = vadd.f32 %v115, %v359
    %v361 = vpop.f32.mrb[0].mxu0
    %v362 = vadd.f32 %v119, %v361
    %v363 = vpop.f32.mrb[0].mxu0
    %v364 = vpop.f32.mrb[0].mxu0
    %365 = vdwg.mxu0
    %v366 = vmax.f32 %v319, 0.0
    %v367 = vmax.f32 %v321, 0.0
    %v368 = vmax.f32 %v360, 0.0
    %v369 = vmax.f32 %v362, 0.0
    %v370 = vpack.c.bf16 %v366, %v366
    %v371 = vpack.c.bf16 %v367, %v367
    %v372 = vpack.c.bf16 %v368, %v368
    %v373 = vpack.c.bf16 %v369, %v369
    %v374 = vld [vmem:[#allocation5] sm:$0xff]
    %v375 = vld [vmem:[#allocation5 + $0x8] sm:$0xff]
    %v376 = vld [vmem:[#allocation5 + $0x10] sm:$0xff]
    %v377 = vld [vmem:[#allocation5 + $0x18] sm:$0xff]
    %v378 = vld [vmem:[#allocation5 + $0x20] sm:$0xff]
    %v379 = vld [vmem:[#allocation5 + $0x28] sm:$0xff]
    %v380 = vld [vmem:[#allocation5 + $0x30] sm:$0xff]
    %v381 = vld [vmem:[#allocation5 + $0x38] sm:$0xff]
    %v382 = vld [vmem:[#allocation5 + $0x40] sm:$0xff]
    %v383 = vld [vmem:[#allocation5 + $0x48] sm:$0xff]
    %v384 = vld [vmem:[#allocation5 + $0x50] sm:$0xff]
    %v385 = vld [vmem:[#allocation5 + $0x58] sm:$0xff]
    %v386 = vld [vmem:[#allocation5 + $0x60] sm:$0xff]
    %v387 = vld [vmem:[#allocation5 + $0x68] sm:$0xff]
    %v388 = vld [vmem:[#allocation5 + $0x70] sm:$0xff]
    %v389 = vld [vmem:[#allocation5 + $0x78] sm:$0xff]
    %v390 = vld [vmem:[#allocation5 + $0x80] sm:$0xff]
    %v391 = vld [vmem:[#allocation5 + $0x88] sm:$0xff]
    %v392 = vld [vmem:[#allocation5 + $0x90] sm:$0xff]
    %v393 = vld [vmem:[#allocation5 + $0x98] sm:$0xff]
    %v394 = vld [vmem:[#allocation5 + $0xa0] sm:$0xff]
    %v395 = vld [vmem:[#allocation5 + $0xa8] sm:$0xff]
    %v396 = vld [vmem:[#allocation5 + $0xb0] sm:$0xff]
    %v397 = vld [vmem:[#allocation5 + $0xb8] sm:$0xff]
    %v398 = vld [vmem:[#allocation5 + $0xc0] sm:$0xff]
    %v399 = vld [vmem:[#allocation5 + $0xc8] sm:$0xff]
    %v400 = vld [vmem:[#allocation5 + $0xd0] sm:$0xff]
    %v401 = vld [vmem:[#allocation5 + $0xd8] sm:$0xff]
    %v402 = vld [vmem:[#allocation5 + $0xe0] sm:$0xff]
    %v403 = vld [vmem:[#allocation5 + $0xe8] sm:$0xff]
    %v404 = vld [vmem:[#allocation5 + $0xf0] sm:$0xff]
    %v405 = vld [vmem:[#allocation5 + $0xf8] sm:$0xff]
    %v406 = vld [vmem:[#allocation5 + $0x100] sm:$0xff]
    %v407 = vld [vmem:[#allocation5 + $0x108] sm:$0xff]
    %v408 = vld [vmem:[#allocation5 + $0x110] sm:$0xff]
    %v409 = vld [vmem:[#allocation5 + $0x118] sm:$0xff]
    %v410 = vld [vmem:[#allocation5 + $0x120] sm:$0xff]
    %v411 = vld [vmem:[#allocation5 + $0x128] sm:$0xff]
    %v412 = vld [vmem:[#allocation5 + $0x130] sm:$0xff]
    %v413 = vld [vmem:[#allocation5 + $0x138] sm:$0xff]
    %v414 = vld [vmem:[#allocation5 + $0x140] sm:$0xff]
    %v415 = vld [vmem:[#allocation5 + $0x148] sm:$0xff]
    %v416 = vld [vmem:[#allocation5 + $0x150] sm:$0xff]
    %v417 = vld [vmem:[#allocation5 + $0x158] sm:$0xff]
    %v418 = vld [vmem:[#allocation5 + $0x160] sm:$0xff]
    %v419 = vld [vmem:[#allocation5 + $0x168] sm:$0xff]
    %v420 = vld [vmem:[#allocation5 + $0x170] sm:$0xff]
    %v421 = vld [vmem:[#allocation5 + $0x178] sm:$0xff]
    %v422 = vld [vmem:[#allocation5 + $0x180] sm:$0xff]
    %v423 = vld [vmem:[#allocation5 + $0x188] sm:$0xff]
    %v424 = vld [vmem:[#allocation5 + $0x190] sm:$0xff]
    %v425 = vld [vmem:[#allocation5 + $0x198] sm:$0xff]
    %v426 = vld [vmem:[#allocation5 + $0x1a0] sm:$0xff]
    %v427 = vld [vmem:[#allocation5 + $0x1a8] sm:$0xff]
    %v428 = vld [vmem:[#allocation5 + $0x1b0] sm:$0xff]
    %v429 = vld [vmem:[#allocation5 + $0x1b8] sm:$0xff]
    %v430 = vld [vmem:[#allocation5 + $0x1c0] sm:$0xff]
    %v431 = vld [vmem:[#allocation5 + $0x1c8] sm:$0xff]
    %v432 = vld [vmem:[#allocation5 + $0x1d0] sm:$0xff]
    %v433 = vld [vmem:[#allocation5 + $0x1d8] sm:$0xff]
    %v434 = vld [vmem:[#allocation5 + $0x1e0] sm:$0xff]
    %v435 = vld [vmem:[#allocation5 + $0x1e8] sm:$0xff]
    %v436 = vld [vmem:[#allocation5 + $0x1f0] sm:$0xff]
    %v437 = vld [vmem:[#allocation5 + $0x1f8] sm:$0xff]
    %v438 = vld [vmem:[#allocation5 + $0x200] sm:$0xff]
    %v439 = vld [vmem:[#allocation5 + $0x208] sm:$0xff]
    %v440 = vld [vmem:[#allocation5 + $0x210] sm:$0xff]
    %v441 = vld [vmem:[#allocation5 + $0x218] sm:$0xff]
    %v442 = vld [vmem:[#allocation5 + $0x220] sm:$0xff]
    %v443 = vld [vmem:[#allocation5 + $0x228] sm:$0xff]
    %v444 = vld [vmem:[#allocation5 + $0x230] sm:$0xff]
    %v445 = vld [vmem:[#allocation5 + $0x238] sm:$0xff]
    %v446 = vld [vmem:[#allocation5 + $0x240] sm:$0xff]
    %v447 = vld [vmem:[#allocation5 + $0x248] sm:$0xff]
    %v448 = vld [vmem:[#allocation5 + $0x250] sm:$0xff]
    %v449 = vld [vmem:[#allocation5 + $0x258] sm:$0xff]
    %v450 = vld [vmem:[#allocation5 + $0x260] sm:$0xff]
    %v451 = vld [vmem:[#allocation5 + $0x268] sm:$0xff]
    %v452 = vld [vmem:[#allocation5 + $0x270] sm:$0xff]
    %v453 = vld [vmem:[#allocation5 + $0x278] sm:$0xff]
    %v454 = vld [vmem:[#allocation5 + $0x280] sm:$0xff]
    %v455 = vld [vmem:[#allocation5 + $0x288] sm:$0xff]
    %v456 = vld [vmem:[#allocation5 + $0x290] sm:$0xff]
    %v457 = vld [vmem:[#allocation5 + $0x298] sm:$0xff]
    %v458 = vld [vmem:[#allocation5 + $0x2a0] sm:$0xff]
    %v459 = vld [vmem:[#allocation5 + $0x2a8] sm:$0xff]
    %v460 = vld [vmem:[#allocation5 + $0x2b0] sm:$0xff]
    %v461 = vld [vmem:[#allocation5 + $0x2b8] sm:$0xff]
    %v462 = vld [vmem:[#allocation5 + $0x2c0] sm:$0xff]
    %v463 = vld [vmem:[#allocation5 + $0x2c8] sm:$0xff]
    %v464 = vld [vmem:[#allocation5 + $0x2d0] sm:$0xff]
    %v465 = vld [vmem:[#allocation5 + $0x2d8] sm:$0xff]
    %v466 = vld [vmem:[#allocation5 + $0x2e0] sm:$0xff]
    %v467 = vld [vmem:[#allocation5 + $0x2e8] sm:$0xff]
    %v468 = vld [vmem:[#allocation5 + $0x2f0] sm:$0xff]
    %v469 = vld [vmem:[#allocation5 + $0x2f8] sm:$0xff]
    %v470 = vld [vmem:[#allocation5 + $0x300] sm:$0xff]
    %v471 = vld [vmem:[#allocation5 + $0x308] sm:$0xff]
    %v472 = vld [vmem:[#allocation5 + $0x310] sm:$0xff]
    %v473 = vld [vmem:[#allocation5 + $0x318] sm:$0xff]
    %v474 = vld [vmem:[#allocation5 + $0x320] sm:$0xff]
    %v475 = vld [vmem:[#allocation5 + $0x328] sm:$0xff]
    %v476 = vld [vmem:[#allocation5 + $0x330] sm:$0xff]
    %v477 = vld [vmem:[#allocation5 + $0x338] sm:$0xff]
    %v478 = vld [vmem:[#allocation5 + $0x340] sm:$0xff]
    %v479 = vld [vmem:[#allocation5 + $0x348] sm:$0xff]
    %v480 = vld [vmem:[#allocation5 + $0x350] sm:$0xff]
    %v481 = vld [vmem:[#allocation5 + $0x358] sm:$0xff]
    %v482 = vld [vmem:[#allocation5 + $0x360] sm:$0xff]
    %v483 = vld [vmem:[#allocation5 + $0x368] sm:$0xff]
    %v484 = vld [vmem:[#allocation5 + $0x370] sm:$0xff]
    %v485 = vld [vmem:[#allocation5 + $0x378] sm:$0xff]
    %v486 = vld [vmem:[#allocation5 + $0x380] sm:$0xff]
    %v487 = vld [vmem:[#allocation5 + $0x388] sm:$0xff]
    %v488 = vld [vmem:[#allocation5 + $0x390] sm:$0xff]
    %v489 = vld [vmem:[#allocation5 + $0x398] sm:$0xff]
    %v490 = vld [vmem:[#allocation5 + $0x3a0] sm:$0xff]
    %v491 = vld [vmem:[#allocation5 + $0x3a8] sm:$0xff]
    %v492 = vld [vmem:[#allocation5 + $0x3b0] sm:$0xff]
    %v493 = vld [vmem:[#allocation5 + $0x3b8] sm:$0xff]
    %v494 = vld [vmem:[#allocation5 + $0x3c0] sm:$0xff]
    %v495 = vld [vmem:[#allocation5 + $0x3c8] sm:$0xff]
    %v496 = vld [vmem:[#allocation5 + $0x3d0] sm:$0xff]
    %v497 = vld [vmem:[#allocation5 + $0x3d8] sm:$0xff]
    %v498 = vld [vmem:[#allocation5 + $0x3e0] sm:$0xff]
    %v499 = vld [vmem:[#allocation5 + $0x3e8] sm:$0xff]
    %v500 = vld [vmem:[#allocation5 + $0x3f0] sm:$0xff]
    %v501 = vld [vmem:[#allocation5 + $0x3f8] sm:$0xff]
    %v502 = vld [vmem:[%s4] sm:$0xf]
    %v504 = vlaneseq
    %v505 = vshrl.u32 %v504, 7
    %v506 = vsub.s32 0, %v505
    %v507 = vrot.slane %v502, %v506
    %v508 = vlaneseq
    %v509 = vshrl.u32 %v508, 7
    %v510 = vsub.s32 1, %v509
    %v511 = vrot.slane %v502, %v510
    %v512 = vlaneseq
    %v513 = vshrl.u32 %v512, 7
    %v514 = vsub.s32 2, %v513
    %v515 = vrot.slane %v502, %v514
    %v516 = vlaneseq
    %v517 = vshrl.u32 %v516, 7
    %v518 = vsub.s32 3, %v517
    %v519 = vrot.slane %v502, %v518
    %v652 = vunpack.c.l.b16 %v374
    %v653 = vunpack.c.h.b16 %v374
    %v654 = vunpack.c.l.b16 %v375
    %v655 = vunpack.c.h.b16 %v375
    %v656 = vunpack.c.l.b16 %v376
    %v657 = vunpack.c.h.b16 %v376
    %v658 = vunpack.c.l.b16 %v377
    %v659 = vunpack.c.h.b16 %v377
    %v660 = vunpack.c.l.b16 %v378
    %v661 = vunpack.c.h.b16 %v378
    %v662 = vunpack.c.l.b16 %v379
    %v663 = vunpack.c.h.b16 %v379
    %v664 = vunpack.c.l.b16 %v380
    %v665 = vunpack.c.h.b16 %v380
    %v666 = vunpack.c.l.b16 %v381
    %v667 = vunpack.c.h.b16 %v381
    %v668 = vunpack.c.l.b16 %v382
    %v669 = vunpack.c.h.b16 %v382
    %v670 = vunpack.c.l.b16 %v383
    %v671 = vunpack.c.h.b16 %v383
    %v672 = vunpack.c.l.b16 %v384
    %v673 = vunpack.c.h.b16 %v384
    %v674 = vunpack.c.l.b16 %v385
    %v675 = vunpack.c.h.b16 %v385
    %v676 = vunpack.c.l.b16 %v386
    %v677 = vunpack.c.h.b16 %v386
    %v678 = vunpack.c.l.b16 %v387
    %v679 = vunpack.c.h.b16 %v387
    %v680 = vunpack.c.l.b16 %v388
    %v681 = vunpack.c.h.b16 %v388
    %v682 = vunpack.c.l.b16 %v389
    %v683 = vunpack.c.h.b16 %v389
    %v684 = vunpack.c.l.b16 %v390
    %v685 = vunpack.c.h.b16 %v390
    %v686 = vunpack.c.l.b16 %v391
    %v687 = vunpack.c.h.b16 %v391
    %v688 = vunpack.c.l.b16 %v392
    %v689 = vunpack.c.h.b16 %v392
    %v690 = vunpack.c.l.b16 %v393
    %v691 = vunpack.c.h.b16 %v393
    %v692 = vunpack.c.l.b16 %v394
    %v693 = vunpack.c.h.b16 %v394
    %v694 = vunpack.c.l.b16 %v395
    %v695 = vunpack.c.h.b16 %v395
    %v696 = vunpack.c.l.b16 %v396
    %v697 = vunpack.c.h.b16 %v396
    %v698 = vunpack.c.l.b16 %v397
    %v699 = vunpack.c.h.b16 %v397
    %v700 = vunpack.c.l.b16 %v398
    %v701 = vunpack.c.h.b16 %v398
    %v702 = vunpack.c.l.b16 %v399
    %v703 = vunpack.c.h.b16 %v399
    %v704 = vunpack.c.l.b16 %v400
    %v705 = vunpack.c.h.b16 %v400
    %v706 = vunpack.c.l.b16 %v401
    %v707 = vunpack.c.h.b16 %v401
    %v708 = vunpack.c.l.b16 %v402
    %v709 = vunpack.c.h.b16 %v402
    %v710 = vunpack.c.l.b16 %v403
    %v711 = vunpack.c.h.b16 %v403
    %v712 = vunpack.c.l.b16 %v404
    %v713 = vunpack.c.h.b16 %v404
    %v714 = vunpack.c.l.b16 %v405
    %v715 = vunpack.c.h.b16 %v405
    %v716 = vunpack.c.l.b16 %v406
    %v717 = vunpack.c.h.b16 %v406
    %v718 = vunpack.c.l.b16 %v407
    %v719 = vunpack.c.h.b16 %v407
    %v720 = vunpack.c.l.b16 %v408
    %v721 = vunpack.c.h.b16 %v408
    %v722 = vunpack.c.l.b16 %v409
    %v723 = vunpack.c.h.b16 %v409
    %v724 = vunpack.c.l.b16 %v410
    %v725 = vunpack.c.h.b16 %v410
    %v726 = vunpack.c.l.b16 %v411
    %v727 = vunpack.c.h.b16 %v411
    %v728 = vunpack.c.l.b16 %v412
    %v729 = vunpack.c.h.b16 %v412
    %v730 = vunpack.c.l.b16 %v413
    %v731 = vunpack.c.h.b16 %v413
    %v732 = vunpack.c.l.b16 %v414
    %v733 = vunpack.c.h.b16 %v414
    %v734 = vunpack.c.l.b16 %v415
    %v735 = vunpack.c.h.b16 %v415
    %v736 = vunpack.c.l.b16 %v416
    %v737 = vunpack.c.h.b16 %v416
    %v738 = vunpack.c.l.b16 %v417
    %v739 = vunpack.c.h.b16 %v417
    %v740 = vunpack.c.l.b16 %v418
    %v741 = vunpack.c.h.b16 %v418
    %v742 = vunpack.c.l.b16 %v419
    %v743 = vunpack.c.h.b16 %v419
    %v744 = vunpack.c.l.b16 %v420
    %v745 = vunpack.c.h.b16 %v420
    %v746 = vunpack.c.l.b16 %v421
    %v747 = vunpack.c.h.b16 %v421
    %v748 = vunpack.c.l.b16 %v422
    %v749 = vunpack.c.h.b16 %v422
    %v750 = vunpack.c.l.b16 %v423
    %v751 = vunpack.c.h.b16 %v423
    %v752 = vunpack.c.l.b16 %v424
    %v753 = vunpack.c.h.b16 %v424
    %v754 = vunpack.c.l.b16 %v425
    %v755 = vunpack.c.h.b16 %v425
    %v756 = vunpack.c.l.b16 %v426
    %v757 = vunpack.c.h.b16 %v426
    %v758 = vunpack.c.l.b16 %v427
    %v759 = vunpack.c.h.b16 %v427
    %v760 = vunpack.c.l.b16 %v428
    %v761 = vunpack.c.h.b16 %v428
    %v762 = vunpack.c.l.b16 %v429
    %v763 = vunpack.c.h.b16 %v429
    %v764 = vunpack.c.l.b16 %v430
    %v765 = vunpack.c.h.b16 %v430
    %v766 = vunpack.c.l.b16 %v431
    %v767 = vunpack.c.h.b16 %v431
    %v768 = vunpack.c.l.b16 %v432
    %v769 = vunpack.c.h.b16 %v432
    %v770 = vunpack.c.l.b16 %v433
    %v771 = vunpack.c.h.b16 %v433
    %v772 = vunpack.c.l.b16 %v434
    %v773 = vunpack.c.h.b16 %v434
    %v774 = vunpack.c.l.b16 %v435
    %v775 = vunpack.c.h.b16 %v435
    %v776 = vunpack.c.l.b16 %v436
    %v777 = vunpack.c.h.b16 %v436
    %v778 = vunpack.c.l.b16 %v437
    %v779 = vunpack.c.h.b16 %v437
    %v780 = vunpack.c.l.b16 %v438
    %v781 = vunpack.c.h.b16 %v438
    %v782 = vunpack.c.l.b16 %v439
    %v783 = vunpack.c.h.b16 %v439
    %v784 = vunpack.c.l.b16 %v440
    %v785 = vunpack.c.h.b16 %v440
    %v786 = vunpack.c.l.b16 %v441
    %v787 = vunpack.c.h.b16 %v441
    %v788 = vunpack.c.l.b16 %v442
    %v789 = vunpack.c.h.b16 %v442
    %v790 = vunpack.c.l.b16 %v443
    %v791 = vunpack.c.h.b16 %v443
    %v792 = vunpack.c.l.b16 %v444
    %v793 = vunpack.c.h.b16 %v444
    %v794 = vunpack.c.l.b16 %v445
    %v795 = vunpack.c.h.b16 %v445
    %v796 = vunpack.c.l.b16 %v446
    %v797 = vunpack.c.h.b16 %v446
    %v798 = vunpack.c.l.b16 %v447
    %v799 = vunpack.c.h.b16 %v447
    %v800 = vunpack.c.l.b16 %v448
    %v801 = vunpack.c.h.b16 %v448
    %v802 = vunpack.c.l.b16 %v449
    %v803 = vunpack.c.h.b16 %v449
    %v804 = vunpack.c.l.b16 %v450
    %v805 = vunpack.c.h.b16 %v450
    %v806 = vunpack.c.l.b16 %v451
    %v807 = vunpack.c.h.b16 %v451
    %v808 = vunpack.c.l.b16 %v452
    %v809 = vunpack.c.h.b16 %v452
    %v810 = vunpack.c.l.b16 %v453
    %v811 = vunpack.c.h.b16 %v453
    %v812 = vunpack.c.l.b16 %v454
    %v813 = vunpack.c.h.b16 %v454
    %v814 = vunpack.c.l.b16 %v455
    %v815 = vunpack.c.h.b16 %v455
    %v816 = vunpack.c.l.b16 %v456
    %v817 = vunpack.c.h.b16 %v456
    %v818 = vunpack.c.l.b16 %v457
    %v819 = vunpack.c.h.b16 %v457
    %v820 = vunpack.c.l.b16 %v458
    %v821 = vunpack.c.h.b16 %v458
    %v822 = vunpack.c.l.b16 %v459
    %v823 = vunpack.c.h.b16 %v459
    %v824 = vunpack.c.l.b16 %v460
    %v825 = vunpack.c.h.b16 %v460
    %v826 = vunpack.c.l.b16 %v461
    %v827 = vunpack.c.h.b16 %v461
    %v828 = vunpack.c.l.b16 %v462
    %v829 = vunpack.c.h.b16 %v462
    %v830 = vunpack.c.l.b16 %v463
    %v831 = vunpack.c.h.b16 %v463
    %v832 = vunpack.c.l.b16 %v464
    %v833 = vunpack.c.h.b16 %v464
    %v834 = vunpack.c.l.b16 %v465
    %v835 = vunpack.c.h.b16 %v465
    %v836 = vunpack.c.l.b16 %v466
    %v837 = vunpack.c.h.b16 %v466
    %v838 = vunpack.c.l.b16 %v467
    %v839 = vunpack.c.h.b16 %v467
    %v840 = vunpack.c.l.b16 %v468
    %v841 = vunpack.c.h.b16 %v468
    %v842 = vunpack.c.l.b16 %v469
    %v843 = vunpack.c.h.b16 %v469
    %v844 = vunpack.c.l.b16 %v470
    %v845 = vunpack.c.h.b16 %v470
    %v846 = vunpack.c.l.b16 %v471
    %v847 = vunpack.c.h.b16 %v471
    %v848 = vunpack.c.l.b16 %v472
    %v849 = vunpack.c.h.b16 %v472
    %v850 = vunpack.c.l.b16 %v473
    %v851 = vunpack.c.h.b16 %v473
    %v852 = vunpack.c.l.b16 %v474
    %v853 = vunpack.c.h.b16 %v474
    %v854 = vunpack.c.l.b16 %v475
    %v855 = vunpack.c.h.b16 %v475
    %v856 = vunpack.c.l.b16 %v476
    %v857 = vunpack.c.h.b16 %v476
    %v858 = vunpack.c.l.b16 %v477
    %v859 = vunpack.c.h.b16 %v477
    %v860 = vunpack.c.l.b16 %v478
    %v861 = vunpack.c.h.b16 %v478
    %v862 = vunpack.c.l.b16 %v479
    %v863 = vunpack.c.h.b16 %v479
    %v864 = vunpack.c.l.b16 %v480
    %v865 = vunpack.c.h.b16 %v480
    %v866 = vunpack.c.l.b16 %v481
    %v867 = vunpack.c.h.b16 %v481
    %v868 = vunpack.c.l.b16 %v482
    %v869 = vunpack.c.h.b16 %v482
    %v870 = vunpack.c.l.b16 %v483
    %v871 = vunpack.c.h.b16 %v483
    %v872 = vunpack.c.l.b16 %v484
    %v873 = vunpack.c.h.b16 %v484
    %v874 = vunpack.c.l.b16 %v485
    %v875 = vunpack.c.h.b16 %v485
    %v876 = vunpack.c.l.b16 %v486
    %v877 = vunpack.c.h.b16 %v486
    %v878 = vunpack.c.l.b16 %v487
    %v879 = vunpack.c.h.b16 %v487
    %v880 = vunpack.c.l.b16 %v488
    %v881 = vunpack.c.h.b16 %v488
    %v882 = vunpack.c.l.b16 %v489
    %v883 = vunpack.c.h.b16 %v489
    %v884 = vunpack.c.l.b16 %v490
    %v885 = vunpack.c.h.b16 %v490
    %v886 = vunpack.c.l.b16 %v491
    %v887 = vunpack.c.h.b16 %v491
    %v888 = vunpack.c.l.b16 %v492
    %v889 = vunpack.c.h.b16 %v492
    %v890 = vunpack.c.l.b16 %v493
    %v891 = vunpack.c.h.b16 %v493
    %v892 = vunpack.c.l.b16 %v494
    %v893 = vunpack.c.h.b16 %v494
    %v894 = vunpack.c.l.b16 %v495
    %v895 = vunpack.c.h.b16 %v495
    %v896 = vunpack.c.l.b16 %v496
    %v897 = vunpack.c.h.b16 %v496
    %v898 = vunpack.c.l.b16 %v497
    %v899 = vunpack.c.h.b16 %v497
    %v900 = vunpack.c.l.b16 %v498
    %v901 = vunpack.c.h.b16 %v498
    %v902 = vunpack.c.l.b16 %v499
    %v903 = vunpack.c.h.b16 %v499
    %v904 = vunpack.c.l.b16 %v500
    %v905 = vunpack.c.h.b16 %v500
    %v906 = vunpack.c.l.b16 %v501
    %v907 = vunpack.c.h.b16 %v501
    %v908 = vpack.c.b16 %v656, %v652
    %v909 = vpack.c.b16 %v657, %v653
    %v910 = vpack.c.b16 %v658, %v654
    %v911 = vpack.c.b16 %v659, %v655
    %v912 = vpack.c.b16 %v664, %v660
    %v913 = vpack.c.b16 %v665, %v661
    %v914 = vpack.c.b16 %v666, %v662
    %v915 = vpack.c.b16 %v667, %v663
    %v916 = vpack.c.b16 %v672, %v668
    %v917 = vpack.c.b16 %v673, %v669
    %v918 = vpack.c.b16 %v674, %v670
    %v919 = vpack.c.b16 %v675, %v671
    %v920 = vpack.c.b16 %v680, %v676
    %v921 = vpack.c.b16 %v681, %v677
    %v922 = vpack.c.b16 %v682, %v678
    %v923 = vpack.c.b16 %v683, %v679
    %v924 = vpack.c.b16 %v688, %v684
    %v925 = vpack.c.b16 %v689, %v685
    %v926 = vpack.c.b16 %v690, %v686
    %v927 = vpack.c.b16 %v691, %v687
    %v928 = vpack.c.b16 %v696, %v692
    %v929 = vpack.c.b16 %v697, %v693
    %v930 = vpack.c.b16 %v698, %v694
    %v931 = vpack.c.b16 %v699, %v695
    %v932 = vpack.c.b16 %v704, %v700
    %v933 = vpack.c.b16 %v705, %v701
    %v934 = vpack.c.b16 %v706, %v702
    %v935 = vpack.c.b16 %v707, %v703
    %v936 = vpack.c.b16 %v712, %v708
    %v937 = vpack.c.b16 %v713, %v709
    %v938 = vpack.c.b16 %v714, %v710
    %v939 = vpack.c.b16 %v715, %v711
    %v940 = vpack.c.b16 %v720, %v716
    %v941 = vpack.c.b16 %v721, %v717
    %v942 = vpack.c.b16 %v722, %v718
    %v943 = vpack.c.b16 %v723, %v719
    %v944 = vpack.c.b16 %v728, %v724
    %v945 = vpack.c.b16 %v729, %v725
    %v946 = vpack.c.b16 %v730, %v726
    %v947 = vpack.c.b16 %v731, %v727
    %v948 = vpack.c.b16 %v736, %v732
    %v949 = vpack.c.b16 %v737, %v733
    %v950 = vpack.c.b16 %v738, %v734
    %v951 = vpack.c.b16 %v739, %v735
    %v952 = vpack.c.b16 %v744, %v740
    %v953 = vpack.c.b16 %v745, %v741
    %v954 = vpack.c.b16 %v746, %v742
    %v955 = vpack.c.b16 %v747, %v743
    %v956 = vpack.c.b16 %v752, %v748
    %v957 = vpack.c.b16 %v753, %v749
    %v958 = vpack.c.b16 %v754, %v750
    %v959 = vpack.c.b16 %v755, %v751
    %v960 = vpack.c.b16 %v760, %v756
    %v961 = vpack.c.b16 %v761, %v757
    %v962 = vpack.c.b16 %v762, %v758
    %v963 = vpack.c.b16 %v763, %v759
    %v964 = vpack.c.b16 %v768, %v764
    %v965 = vpack.c.b16 %v769, %v765
    %v966 = vpack.c.b16 %v770, %v766
    %v967 = vpack.c.b16 %v771, %v767
    %v968 = vpack.c.b16 %v776, %v772
    %v969 = vpack.c.b16 %v777, %v773
    %v970 = vpack.c.b16 %v778, %v774
    %v971 = vpack.c.b16 %v779, %v775
    %v972 = vpack.c.b16 %v784, %v780
    %v973 = vpack.c.b16 %v785, %v781
    %v974 = vpack.c.b16 %v786, %v782
    %v975 = vpack.c.b16 %v787, %v783
    %v976 = vpack.c.b16 %v792, %v788
    %v977 = vpack.c.b16 %v793, %v789
    %v978 = vpack.c.b16 %v794, %v790
    %v979 = vpack.c.b16 %v795, %v791
    %v980 = vpack.c.b16 %v800, %v796
    %v981 = vpack.c.b16 %v801, %v797
    %v982 = vpack.c.b16 %v802, %v798
    %v983 = vpack.c.b16 %v803, %v799
    %v984 = vpack.c.b16 %v808, %v804
    %v985 = vpack.c.b16 %v809, %v805
    %v986 = vpack.c.b16 %v810, %v806
    %v987 = vpack.c.b16 %v811, %v807
    %v988 = vpack.c.b16 %v816, %v812
    %v989 = vpack.c.b16 %v817, %v813
    %v990 = vpack.c.b16 %v818, %v814
    %v991 = vpack.c.b16 %v819, %v815
    %v992 = vpack.c.b16 %v824, %v820
    %v993 = vpack.c.b16 %v825, %v821
    %v994 = vpack.c.b16 %v826, %v822
    %v995 = vpack.c.b16 %v827, %v823
    %v996 = vpack.c.b16 %v832, %v828
    %v997 = vpack.c.b16 %v833, %v829
    %v998 = vpack.c.b16 %v834, %v830
    %v999 = vpack.c.b16 %v835, %v831
    %v1000 = vpack.c.b16 %v840, %v836
    %v1001 = vpack.c.b16 %v841, %v837
    %v1002 = vpack.c.b16 %v842, %v838
    %v1003 = vpack.c.b16 %v843, %v839
    %v1004 = vpack.c.b16 %v848, %v844
    %v1005 = vpack.c.b16 %v849, %v845
    %v1006 = vpack.c.b16 %v850, %v846
    %v1007 = vpack.c.b16 %v851, %v847
    %v1008 = vpack.c.b16 %v856, %v852
    %v1009 = vpack.c.b16 %v857, %v853
    %v1010 = vpack.c.b16 %v858, %v854
    %v1011 = vpack.c.b16 %v859, %v855
    %v1012 = vpack.c.b16 %v864, %v860
    %v1013 = vpack.c.b16 %v865, %v861
    %v1014 = vpack.c.b16 %v866, %v862
    %v1015 = vpack.c.b16 %v867, %v863
    %v1016 = vpack.c.b16 %v872, %v868
    %v1017 = vpack.c.b16 %v873, %v869
    %v1018 = vpack.c.b16 %v874, %v870
    %v1019 = vpack.c.b16 %v875, %v871
    %v1020 = vpack.c.b16 %v880, %v876
    %v1021 = vpack.c.b16 %v881, %v877
    %v1022 = vpack.c.b16 %v882, %v878
    %v1023 = vpack.c.b16 %v883, %v879
    %v1024 = vpack.c.b16 %v888, %v884
    %v1025 = vpack.c.b16 %v889, %v885
    %v1026 = vpack.c.b16 %v890, %v886
    %v1027 = vpack.c.b16 %v891, %v887
    %v1028 = vpack.c.b16 %v896, %v892
    %v1029 = vpack.c.b16 %v897, %v893
    %v1030 = vpack.c.b16 %v898, %v894
    %v1031 = vpack.c.b16 %v899, %v895
    %v1032 = vpack.c.b16 %v904, %v900
    %v1033 = vpack.c.b16 %v905, %v901
    %v1034 = vpack.c.b16 %v906, %v902
    %v1035 = vpack.c.b16 %v907, %v903
    %1164 = vmatprep.subr.bf16.mxu0 %v909
    %1165 = vmatpush1.bf16.msra.mxu0 %v908
    %1166 = vmatprep.subr.bf16.mxu0 %v913
    %1167 = vmatpush1.bf16.msra.mxu0 %v912
    %1168 = vmatprep.subr.bf16.mxu0 %v917
    %1169 = vmatpush1.bf16.msra.mxu0 %v916
    %1170 = vmatprep.subr.bf16.mxu0 %v921
    %1171 = vmatpush1.bf16.msra.mxu0 %v920
    %1172 = vmatprep.subr.bf16.mxu0 %v925
    %1173 = vmatpush1.bf16.msra.mxu0 %v924
    %1174 = vmatprep.subr.bf16.mxu0 %v929
    %1175 = vmatpush1.bf16.msra.mxu0 %v928
    %1176 = vmatprep.subr.bf16.mxu0 %v933
    %1177 = vmatpush1.bf16.msra.mxu0 %v932
    %1178 = vmatprep.subr.bf16.mxu0 %v937
    %1179 = vmatpush1.bf16.msra.mxu0 %v936
    %1180 = vmatprep.subr.bf16.mxu0 %v941
    %1181 = vmatpush1.bf16.msra.mxu0 %v940
    %1182 = vmatprep.subr.bf16.mxu0 %v945
    %1183 = vmatpush1.bf16.msra.mxu0 %v944
    %1184 = vmatprep.subr.bf16.mxu0 %v949
    %1185 = vmatpush1.bf16.msra.mxu0 %v948
    %1186 = vmatprep.subr.bf16.mxu0 %v953
    %1187 = vmatpush1.bf16.msra.mxu0 %v952
    %1188 = vmatprep.subr.bf16.mxu0 %v957
    %1189 = vmatpush1.bf16.msra.mxu0 %v956
    %1190 = vmatprep.subr.bf16.mxu0 %v961
    %1191 = vmatpush1.bf16.msra.mxu0 %v960
    %1192 = vmatprep.subr.bf16.mxu0 %v965
    %1193 = vmatpush1.bf16.msra.mxu0 %v964
    %1194 = vmatprep.subr.bf16.mxu0 %v969
    %1195 = vmatpush1.bf16.msra.mxu0 %v968
    %1196 = vmatprep.mubr.bf16.mxu0 %v371
    %1197 = vmatmul.mubr.bf16.gmra.mrb[0].mxu0 %v370
    %v1198 = vpop.f32.mrb[0].mxu0
    %v1199 = vadd.f32 %v507, %v1198
    %v1200 = vpop.f32.mrb[0].mxu0
    %v1201 = vadd.f32 %v511, %v1200
    %v1202 = vpop.f32.mrb[0].mxu0
    %v1203 = vpop.f32.mrb[0].mxu0
    %1204 = vdwg.mxu0
    %1205 = vmatprep.subr.bf16.mxu0 %v973
    %1206 = vmatpush1.bf16.msra.mxu0 %v972
    %1207 = vmatprep.subr.bf16.mxu0 %v977
    %1208 = vmatpush1.bf16.msra.mxu0 %v976
    %1209 = vmatprep.subr.bf16.mxu0 %v981
    %1210 = vmatpush1.bf16.msra.mxu0 %v980
    %1211 = vmatprep.subr.bf16.mxu0 %v985
    %1212 = vmatpush1.bf16.msra.mxu0 %v984
    %1213 = vmatprep.subr.bf16.mxu0 %v989
    %1214 = vmatpush1.bf16.msra.mxu0 %v988
    %1215 = vmatprep.subr.bf16.mxu0 %v993
    %1216 = vmatpush1.bf16.msra.mxu0 %v992
    %1217 = vmatprep.subr.bf16.mxu0 %v997
    %1218 = vmatpush1.bf16.msra.mxu0 %v996
    %1219 = vmatprep.subr.bf16.mxu0 %v1001
    %1220 = vmatpush1.bf16.msra.mxu0 %v1000
    %1221 = vmatprep.subr.bf16.mxu0 %v1005
    %1222 = vmatpush1.bf16.msra.mxu0 %v1004
    %1223 = vmatprep.subr.bf16.mxu0 %v1009
    %1224 = vmatpush1.bf16.msra.mxu0 %v1008
    %1225 = vmatprep.subr.bf16.mxu0 %v1013
    %1226 = vmatpush1.bf16.msra.mxu0 %v1012
    %1227 = vmatprep.subr.bf16.mxu0 %v1017
    %1228 = vmatpush1.bf16.msra.mxu0 %v1016
    %1229 = vmatprep.subr.bf16.mxu0 %v1021
    %1230 = vmatpush1.bf16.msra.mxu0 %v1020
    %1231 = vmatprep.subr.bf16.mxu0 %v1025
    %1232 = vmatpush1.bf16.msra.mxu0 %v1024
    %1233 = vmatprep.subr.bf16.mxu0 %v1029
    %1234 = vmatpush1.bf16.msra.mxu0 %v1028
    %1235 = vmatprep.subr.bf16.mxu0 %v1033
    %1236 = vmatpush1.bf16.msra.mxu0 %v1032
    %1237 = vmatprep.mubr.bf16.mxu0 %v373
    %1238 = vmatmul.mubr.bf16.gmra.mrb[0].mxu0 %v372
    %v1239 = vpop.f32.mrb[0].mxu0
    %v1240 = vadd.f32 %v1199, %v1239
    %v1241 = vpop.f32.mrb[0].mxu0
    %v1242 = vadd.f32 %v1201, %v1241
    %v1243 = vpop.f32.mrb[0].mxu0
    %v1244 = vpop.f32.mrb[0].mxu0
    %1245 = vdwg.mxu0
    %1246 = vmatprep.subr.bf16.mxu0 %v911
    %1247 = vmatpush1.bf16.msra.mxu0 %v910
    %1248 = vmatprep.subr.bf16.mxu0 %v915
    %1249 = vmatpush1.bf16.msra.mxu0 %v914
    %1250 = vmatprep.subr.bf16.mxu0 %v919
    %1251 = vmatpush1.bf16.msra.mxu0 %v918
    %1252 = vmatprep.subr.bf16.mxu0 %v923
    %1253 = vmatpush1.bf16.msra.mxu0 %v922
    %1254 = vmatprep.subr.bf16.mxu0 %v927
    %1255 = vmatpush1.bf16.msra.mxu0 %v926
    %1256 = vmatprep.subr.bf16.mxu0 %v931
    %1257 = vmatpush1.bf16.msra.mxu0 %v930
    %1258 = vmatprep.subr.bf16.mxu0 %v935
    %1259 = vmatpush1.bf16.msra.mxu0 %v934
    %1260 = vmatprep.subr.bf16.mxu0 %v939
    %1261 = vmatpush1.bf16.msra.mxu0 %v938
    %1262 = vmatprep.subr.bf16.mxu0 %v943
    %1263 = vmatpush1.bf16.msra.mxu0 %v942
    %1264 = vmatprep.subr.bf16.mxu0 %v947
    %1265 = vmatpush1.bf16.msra.mxu0 %v946
    %1266 = vmatprep.subr.bf16.mxu0 %v951
    %1267 = vmatpush1.bf16.msra.mxu0 %v950
    %1268 = vmatprep.subr.bf16.mxu0 %v955
    %1269 = vmatpush1.bf16.msra.mxu0 %v954
    %1270 = vmatprep.subr.bf16.mxu0 %v959
    %1271 = vmatpush1.bf16.msra.mxu0 %v958
    %1272 = vmatprep.subr.bf16.mxu0 %v963
    %1273 = vmatpush1.bf16.msra.mxu0 %v962
    %1274 = vmatprep.subr.bf16.mxu0 %v967
    %1275 = vmatpush1.bf16.msra.mxu0 %v966
    %1276 = vmatprep.subr.bf16.mxu0 %v971
    %1277 = vmatpush1.bf16.msra.mxu0 %v970
    %1278 = vmatprep.mubr.bf16.mxu0 %v371
    %1279 = vmatmul.mubr.bf16.gmra.mrb[0].mxu0 %v370
    %v1280 = vpop.f32.mrb[0].mxu0
    %v1281 = vadd.f32 %v515, %v1280
    %v1282 = vpop.f32.mrb[0].mxu0
    %v1283 = vadd.f32 %v519, %v1282
    %v1284 = vpop.f32.mrb[0].mxu0
    %v1285 = vpop.f32.mrb[0].mxu0
    %1286 = vdwg.mxu0
    %1287 = vmatprep.subr.bf16.mxu0 %v975
    %1288 = vmatpush1.bf16.msra.mxu0 %v974
    %1289 = vmatprep.subr.bf16.mxu0 %v979
    %1290 = vmatpush1.bf16.msra.mxu0 %v978
    %1291 = vmatprep.subr.bf16.mxu0 %v983
    %1292 = vmatpush1.bf16.msra.mxu0 %v982
    %1293 = vmatprep.subr.bf16.mxu0 %v987
    %1294 = vmatpush1.bf16.msra.mxu0 %v986
    %1295 = vmatprep.subr.bf16.mxu0 %v991
    %1296 = vmatpush1.bf16.msra.mxu0 %v990
    %1297 = vmatprep.subr.bf16.mxu0 %v995
    %1298 = vmatpush1.bf16.msra.mxu0 %v994
    %1299 = vmatprep.subr.bf16.mxu0 %v999
    %1300 = vmatpush1.bf16.msra.mxu0 %v998
    %1301 = vmatprep.subr.bf16.mxu0 %v1003
    %1302 = vmatpush1.bf16.msra.mxu0 %v1002
    %1303 = vmatprep.subr.bf16.mxu0 %v1007
    %1304 = vmatpush1.bf16.msra.mxu0 %v1006
    %1305 = vmatprep.subr.bf16.mxu0 %v1011
    %1306 = vmatpush1.bf16.msra.mxu0 %v1010
    %1307 = vmatprep.subr.bf16.mxu0 %v1015
    %1308 = vmatpush1.bf16.msra.mxu0 %v1014
    %1309 = vmatprep.subr.bf16.mxu0 %v1019
    %1310 = vmatpush1.bf16.msra.mxu0 %v1018
    %1311 = vmatprep.subr.bf16.mxu0 %v1023
    %1312 = vmatpush1.bf16.msra.mxu0 %v1022
    %1313 = vmatprep.subr.bf16.mxu0 %v1027
    %1314 = vmatpush1.bf16.msra.mxu0 %v1026
    %1315 = vmatprep.subr.bf16.mxu0 %v1031
    %1316 = vmatpush1.bf16.msra.mxu0 %v1030
    %1317 = vmatprep.subr.bf16.mxu0 %v1035
    %1318 = vmatpush1.bf16.msra.mxu0 %v1034
    %1319 = vmatprep.mubr.bf16.mxu0 %v373
    %1320 = vmatmul.mubr.bf16.gmra.mrb[0].mxu0 %v372
    %v1321 = vpop.f32.mrb[0].mxu0
    %v1322 = vadd.f32 %v1281, %v1321
    %v1323 = vpop.f32.mrb[0].mxu0
    %v1324 = vadd.f32 %v1283, %v1323
    %v1325 = vpop.f32.mrb[0].mxu0
    %v1326 = vpop.f32.mrb[0].mxu0
    %1327 = vdwg.mxu0
    %v1328 = vmax.f32 %v1240, 0.0
    %v1329 = vmax.f32 %v1242, 0.0
    %v1330 = vmax.f32 %v1322, 0.0
    %v1331 = vmax.f32 %v1324, 0.0
    %v1332 = vpack.c.bf16 %v1328, %v1328
    %v1333 = vpack.c.bf16 %v1329, %v1329
    %v1334 = vpack.c.bf16 %v1330, %v1330
    %v1335 = vpack.c.bf16 %v1331, %v1331
    %v1336 = vld [vmem:[#allocation7] sm:$0xf]
    %v1337 = vld [vmem:[#allocation7 + $0x4] sm:$0xf]
    %v1338 = vld [vmem:[#allocation7 + $0x8] sm:$0xf]
    %v1339 = vld [vmem:[#allocation7 + $0xc] sm:$0xf]
    %v1340 = vld [vmem:[#allocation7 + $0x10] sm:$0xf]
    %v1341 = vld [vmem:[#allocation7 + $0x14] sm:$0xf]
    %v1342 = vld [vmem:[#allocation7 + $0x18] sm:$0xf]
    %v1343 = vld [vmem:[#allocation7 + $0x1c] sm:$0xf]
    %v1344 = vld [vmem:[#allocation7 + $0x20] sm:$0xf]
    %v1345 = vld [vmem:[#allocation7 + $0x24] sm:$0xf]
    %v1346 = vld [vmem:[#allocation7 + $0x28] sm:$0xf]
    %v1347 = vld [vmem:[#allocation7 + $0x2c] sm:$0xf]
    %v1348 = vld [vmem:[#allocation7 + $0x30] sm:$0xf]
    %v1349 = vld [vmem:[#allocation7 + $0x34] sm:$0xf]
    %v1350 = vld [vmem:[#allocation7 + $0x38] sm:$0xf]
    %v1351 = vld [vmem:[#allocation7 + $0x3c] sm:$0xf]
    %v1352 = vld [vmem:[#allocation7 + $0x40] sm:$0xf]
    %v1353 = vld [vmem:[#allocation7 + $0x44] sm:$0xf]
    %v1354 = vld [vmem:[#allocation7 + $0x48] sm:$0xf]
    %v1355 = vld [vmem:[#allocation7 + $0x4c] sm:$0xf]
    %v1356 = vld [vmem:[#allocation7 + $0x50] sm:$0xf]
    %v1357 = vld [vmem:[#allocation7 + $0x54] sm:$0xf]
    %v1358 = vld [vmem:[#allocation7 + $0x58] sm:$0xf]
    %v1359 = vld [vmem:[#allocation7 + $0x5c] sm:$0xf]
    %v1360 = vld [vmem:[#allocation7 + $0x60] sm:$0xf]
    %v1361 = vld [vmem:[#allocation7 + $0x64] sm:$0xf]
    %v1362 = vld [vmem:[#allocation7 + $0x68] sm:$0xf]
    %v1363 = vld [vmem:[#allocation7 + $0x6c] sm:$0xf]
    %v1364 = vld [vmem:[#allocation7 + $0x70] sm:$0xf]
    %v1365 = vld [vmem:[#allocation7 + $0x74] sm:$0xf]
    %v1366 = vld [vmem:[#allocation7 + $0x78] sm:$0xf]
    %v1367 = vld [vmem:[#allocation7 + $0x7c] sm:$0xf]
    %v1368 = vld [vmem:[#allocation7 + $0x80] sm:$0xf]
    %v1369 = vld [vmem:[#allocation7 + $0x84] sm:$0xf]
    %v1370 = vld [vmem:[#allocation7 + $0x88] sm:$0xf]
    %v1371 = vld [vmem:[#allocation7 + $0x8c] sm:$0xf]
    %v1372 = vld [vmem:[#allocation7 + $0x90] sm:$0xf]
    %v1373 = vld [vmem:[#allocation7 + $0x94] sm:$0xf]
    %v1374 = vld [vmem:[#allocation7 + $0x98] sm:$0xf]
    %v1375 = vld [vmem:[#allocation7 + $0x9c] sm:$0xf]
    %v1376 = vld [vmem:[#allocation7 + $0xa0] sm:$0xf]
    %v1377 = vld [vmem:[#allocation7 + $0xa4] sm:$0xf]
    %v1378 = vld [vmem:[#allocation7 + $0xa8] sm:$0xf]
    %v1379 = vld [vmem:[#allocation7 + $0xac] sm:$0xf]
    %v1380 = vld [vmem:[#allocation7 + $0xb0] sm:$0xf]
    %v1381 = vld [vmem:[#allocation7 + $0xb4] sm:$0xf]
    %v1382 = vld [vmem:[#allocation7 + $0xb8] sm:$0xf]
    %v1383 = vld [vmem:[#allocation7 + $0xbc] sm:$0xf]
    %v1384 = vld [vmem:[#allocation7 + $0xc0] sm:$0xf]
    %v1385 = vld [vmem:[#allocation7 + $0xc4] sm:$0xf]
    %v1386 = vld [vmem:[#allocation7 + $0xc8] sm:$0xf]
    %v1387 = vld [vmem:[#allocation7 + $0xcc] sm:$0xf]
    %v1388 = vld [vmem:[#allocation7 + $0xd0] sm:$0xf]
    %v1389 = vld [vmem:[#allocation7 + $0xd4] sm:$0xf]
    %v1390 = vld [vmem:[#allocation7 + $0xd8] sm:$0xf]
    %v1391 = vld [vmem:[#allocation7 + $0xdc] sm:$0xf]
    %v1392 = vld [vmem:[#allocation7 + $0xe0] sm:$0xf]
    %v1393 = vld [vmem:[#allocation7 + $0xe4] sm:$0xf]
    %v1394 = vld [vmem:[#allocation7 + $0xe8] sm:$0xf]
    %v1395 = vld [vmem:[#allocation7 + $0xec] sm:$0xf]
    %v1396 = vld [vmem:[#allocation7 + $0xf0] sm:$0xf]
    %v1397 = vld [vmem:[#allocation7 + $0xf4] sm:$0xf]
    %v1398 = vld [vmem:[#allocation7 + $0xf8] sm:$0xf]
    %v1399 = vld [vmem:[#allocation7 + $0xfc] sm:$0xf]
    %v1400 = vld [vmem:[%s6] sm:$0x1]
    %v1402 = vlaneseq
    %v1403 = vshrl.u32 %v1402, 7
    %v1404 = vsub.s32 0, %v1403
    %v1405 = vrot.slane %v1400, %v1404
    %v1471 = vunpack.c.l.b16 %v1336
    %v1472 = vunpack.c.l.b16 %v1337
    %v1473 = vunpack.c.l.b16 %v1338
    %v1474 = vunpack.c.l.b16 %v1339
    %v1475 = vunpack.c.l.b16 %v1340
    %v1476 = vunpack.c.l.b16 %v1341
    %v1477 = vunpack.c.l.b16 %v1342
    %v1478 = vunpack.c.l.b16 %v1343
    %v1479 = vunpack.c.l.b16 %v1344
    %v1480 = vunpack.c.l.b16 %v1345
    %v1481 = vunpack.c.l.b16 %v1346
    %v1482 = vunpack.c.l.b16 %v1347
    %v1483 = vunpack.c.l.b16 %v1348
    %v1484 = vunpack.c.l.b16 %v1349
    %v1485 = vunpack.c.l.b16 %v1350
    %v1486 = vunpack.c.l.b16 %v1351
    %v1487 = vunpack.c.l.b16 %v1352
    %v1488 = vunpack.c.l.b16 %v1353
    %v1489 = vunpack.c.l.b16 %v1354
    %v1490 = vunpack.c.l.b16 %v1355
    %v1491 = vunpack.c.l.b16 %v1356
    %v1492 = vunpack.c.l.b16 %v1357
    %v1493 = vunpack.c.l.b16 %v1358
    %v1494 = vunpack.c.l.b16 %v1359
    %v1495 = vunpack.c.l.b16 %v1360
    %v1496 = vunpack.c.l.b16 %v1361
    %v1497 = vunpack.c.l.b16 %v1362
    %v1498 = vunpack.c.l.b16 %v1363
    %v1499 = vunpack.c.l.b16 %v1364
    %v1500 = vunpack.c.l.b16 %v1365
    %v1501 = vunpack.c.l.b16 %v1366
    %v1502 = vunpack.c.l.b16 %v1367
    %v1503 = vunpack.c.l.b16 %v1368
    %v1504 = vunpack.c.l.b16 %v1369
    %v1505 = vunpack.c.l.b16 %v1370
    %v1506 = vunpack.c.l.b16 %v1371
    %v1507 = vunpack.c.l.b16 %v1372
    %v1508 = vunpack.c.l.b16 %v1373
    %v1509 = vunpack.c.l.b16 %v1374
    %v1510 = vunpack.c.l.b16 %v1375
    %v1511 = vunpack.c.l.b16 %v1376
    %v1512 = vunpack.c.l.b16 %v1377
    %v1513 = vunpack.c.l.b16 %v1378
    %v1514 = vunpack.c.l.b16 %v1379
    %v1515 = vunpack.c.l.b16 %v1380
    %v1516 = vunpack.c.l.b16 %v1381
    %v1517 = vunpack.c.l.b16 %v1382
    %v1518 = vunpack.c.l.b16 %v1383
    %v1519 = vunpack.c.l.b16 %v1384
    %v1520 = vunpack.c.l.b16 %v1385
    %v1521 = vunpack.c.l.b16 %v1386
    %v1522 = vunpack.c.l.b16 %v1387
    %v1523 = vunpack.c.l.b16 %v1388
    %v1524 = vunpack.c.l.b16 %v1389
    %v1525 = vunpack.c.l.b16 %v1390
    %v1526 = vunpack.c.l.b16 %v1391
    %v1527 = vunpack.c.l.b16 %v1392
    %v1528 = vunpack.c.l.b16 %v1393
    %v1529 = vunpack.c.l.b16 %v1394
    %v1530 = vunpack.c.l.b16 %v1395
    %v1531 = vunpack.c.l.b16 %v1396
    %v1532 = vunpack.c.l.b16 %v1397
    %v1533 = vunpack.c.l.b16 %v1398
    %v1534 = vunpack.c.l.b16 %v1399
    %v1535 = vpack.c.b16 %v1472, %v1471
    %v1536 = vpack.c.b16 %v1474, %v1473
    %v1537 = vpack.c.b16 %v1476, %v1475
    %v1538 = vpack.c.b16 %v1478, %v1477
    %v1539 = vpack.c.b16 %v1480, %v1479
    %v1540 = vpack.c.b16 %v1482, %v1481
    %v1541 = vpack.c.b16 %v1484, %v1483
    %v1542 = vpack.c.b16 %v1486, %v1485
    %v1543 = vpack.c.b16 %v1488, %v1487
    %v1544 = vpack.c.b16 %v1490, %v1489
    %v1545 = vpack.c.b16 %v1492, %v1491
    %v1546 = vpack.c.b16 %v1494, %v1493
    %v1547 = vpack.c.b16 %v1496, %v1495
    %v1548 = vpack.c.b16 %v1498, %v1497
    %v1549 = vpack.c.b16 %v1500, %v1499
    %v1550 = vpack.c.b16 %v1502, %v1501
    %v1551 = vpack.c.b16 %v1504, %v1503
    %v1552 = vpack.c.b16 %v1506, %v1505
    %v1553 = vpack.c.b16 %v1508, %v1507
    %v1554 = vpack.c.b16 %v1510, %v1509
    %v1555 = vpack.c.b16 %v1512, %v1511
    %v1556 = vpack.c.b16 %v1514, %v1513
    %v1557 = vpack.c.b16 %v1516, %v1515
    %v1558 = vpack.c.b16 %v1518, %v1517
    %v1559 = vpack.c.b16 %v1520, %v1519
    %v1560 = vpack.c.b16 %v1522, %v1521
    %v1561 = vpack.c.b16 %v1524, %v1523
    %v1562 = vpack.c.b16 %v1526, %v1525
    %v1563 = vpack.c.b16 %v1528, %v1527
    %v1564 = vpack.c.b16 %v1530, %v1529
    %v1565 = vpack.c.b16 %v1532, %v1531
    %v1566 = vpack.c.b16 %v1534, %v1533
    %1599 = vmatprep.subr.bf16.mxu0 0
    %1600 = vmatpush1.bf16.msra.mxu0 %v1535
    %1601 = vmatprep.subr.bf16.mxu0 0
    %1602 = vmatpush1.bf16.msra.mxu0 %v1536
    %1603 = vmatprep.subr.bf16.mxu0 0
    %1604 = vmatpush1.bf16.msra.mxu0 %v1537
    %1605 = vmatprep.subr.bf16.mxu0 0
    %1606 = vmatpush1.bf16.msra.mxu0 %v1538
    %1607 = vmatprep.subr.bf16.mxu0 0
    %1608 = vmatpush1.bf16.msra.mxu0 %v1539
    %1609 = vmatprep.subr.bf16.mxu0 0
    %1610 = vmatpush1.bf16.msra.mxu0 %v1540
    %1611 = vmatprep.subr.bf16.mxu0 0
    %1612 = vmatpush1.bf16.msra.mxu0 %v1541
    %1613 = vmatprep.subr.bf16.mxu0 0
    %1614 = vmatpush1.bf16.msra.mxu0 %v1542
    %1615 = vmatprep.subr.bf16.mxu0 0
    %1616 = vmatpush1.bf16.msra.mxu0 %v1543
    %1617 = vmatprep.subr.bf16.mxu0 0
    %1618 = vmatpush1.bf16.msra.mxu0 %v1544
    %1619 = vmatprep.subr.bf16.mxu0 0
    %1620 = vmatpush1.bf16.msra.mxu0 %v1545
    %1621 = vmatprep.subr.bf16.mxu0 0
    %1622 = vmatpush1.bf16.msra.mxu0 %v1546
    %1623 = vmatprep.subr.bf16.mxu0 0
    %1624 = vmatpush1.bf16.msra.mxu0 %v1547
    %1625 = vmatprep.subr.bf16.mxu0 0
    %1626 = vmatpush1.bf16.msra.mxu0 %v1548
    %1627 = vmatprep.subr.bf16.mxu0 0
    %1628 = vmatpush1.bf16.msra.mxu0 %v1549
    %1629 = vmatprep.subr.bf16.mxu0 0
    %1630 = vmatpush1.bf16.msra.mxu0 %v1550
    %1631 = vmatprep.mubr.bf16.mxu0 %v1333
    %1632 = vmatmul.mubr.bf16.gmra.mrb[0].mxu0 %v1332
    %v1633 = vpop.f32.mrb[0].mxu0
    %v1634 = vadd.f32 %v1405, %v1633
    %v1635 = vpop.f32.mrb[0].mxu0
    %v1636 = vpop.f32.mrb[0].mxu0
    %v1637 = vpop.f32.mrb[0].mxu0
    %1638 = vdwg.mxu0
    %1639 = vmatprep.subr.bf16.mxu0 0
    %1640 = vmatpush1.bf16.msra.mxu0 %v1551
    %1641 = vmatprep.subr.bf16.mxu0 0
    %1642 = vmatpush1.bf16.msra.mxu0 %v1552
    %1643 = vmatprep.subr.bf16.mxu0 0
    %1644 = vmatpush1.bf16.msra.mxu0 %v1553
    %1645 = vmatprep.subr.bf16.mxu0 0
    %1646 = vmatpush1.bf16.msra.mxu0 %v1554
    %1647 = vmatprep.subr.bf16.mxu0 0
    %1648 = vmatpush1.bf16.msra.mxu0 %v1555
    %1649 = vmatprep.subr.bf16.mxu0 0
    %1650 = vmatpush1.bf16.msra.mxu0 %v1556
    %1651 = vmatprep.subr.bf16.mxu0 0
    %1652 = vmatpush1.bf16.msra.mxu0 %v1557
    %1653 = vmatprep.subr.bf16.mxu0 0
    %1654 = vmatpush1.bf16.msra.mxu0 %v1558
    %1655 = vmatprep.subr.bf16.mxu0 0
    %1656 = vmatpush1.bf16.msra.mxu0 %v1559
    %1657 = vmatprep.subr.bf16.mxu0 0
    %1658 = vmatpush1.bf16.msra.mxu0 %v1560
    %1659 = vmatprep.subr.bf16.mxu0 0
    %1660 = vmatpush1.bf16.msra.mxu0 %v1561
    %1661 = vmatprep.subr.bf16.mxu0 0
    %1662 = vmatpush1.bf16.msra.mxu0 %v1562
    %1663 = vmatprep.subr.bf16.mxu0 0
    %1664 = vmatpush1.bf16.msra.mxu0 %v1563
    %1665 = vmatprep.subr.bf16.mxu0 0
    %1666 = vmatpush1.bf16.msra.mxu0 %v1564
    %1667 = vmatprep.subr.bf16.mxu0 0
    %1668 = vmatpush1.bf16.msra.mxu0 %v1565
    %1669 = vmatprep.subr.bf16.mxu0 0
    %1670 = vmatpush1.bf16.msra.mxu0 %v1566
    %1671 = vmatprep.mubr.bf16.mxu0 %v1335
    %1672 = vmatmul.mubr.bf16.gmra.mrb[0].mxu0 %v1334
    %v1673 = vpop.f32.mrb[0].mxu0
    %v1674 = vadd.f32 %v1634, %v1673
    %v1675 = vpop.f32.mrb[0].mxu0
    %v1676 = vpop.f32.mrb[0].mxu0
    %v1677 = vpop.f32.mrb[0].mxu0
    %1678 = vdwg.mxu0
    %1679 = vst [vmem:[#allocation8] sm:$0xff] %v1674
    // Predicated region
    $region42: #{_feedforward_impl.1} parent=1 // pred_check
      _
    $region43: #{_feedforward_impl.1} parent=1 // pred_check_branch
      %1681 = sbr.rel (0) target = $region45
    $region44: #{_feedforward_impl.1} parent=1 // pred_region
      %s1683 = ssub.s32 128, 128
      %1684 = vsyncadd [#allocation4], %s1683
      %s1686 = sshll.u32 [#allocation8], 4
      %s1687 = int_to_ptr.vmem [resolvable:$true] %s1686
      %1689 = dma.vmem_to_hbm [thread:$0]  %s1687, 128, %s7, [#allocation4]
    $region45: #{_feedforward_impl.1} parent=1 // pred_fallthru
      _
    // Predicated region
    $region46: #{_feedforward_impl.1} parent=1 // pred_check
      _
    $region47: #{_feedforward_impl.1} parent=1 // pred_check_branch
      %1691 = sbr.rel (0) target = $region49
    $region48: #{_feedforward_impl.1} parent=1 // pred_region
      %1692 = dma.done [#allocation4], 128
    $region49: #{_feedforward_impl.1} parent=1 // pred_fallthru
      _
    %1693 = vsyncpa [#allocation3], 1
    %1694 = vsyncpa [#allocation6], 1
    %1695 = vsyncpa [#allocation4], 1

</llo_original>
